<compile_context>
chip_gen: v6e
topology: v6e:2x2x1
jax: 0.10.0
libtpu: 0.0.40
codegen_flags: <defaults>
</compile_context>

<pallas_src>
import functools

import jax
import jax.numpy as jnp
from jax.experimental import pallas as pl
from jax.experimental.pallas import tpu as pltpu


def _smoothed_distill_kernel(logits_ref, bias_ref, teacher_ref, labels_ref,
                             out_ref, *, scaling_portion: int,
                             batch_size: int, tile_rows: int):
    logits = logits_ref[...].astype(jnp.float32)            # [TB, C]
    bias_logits = bias_ref[...].astype(jnp.float32)         # [TB, C]
    teacher_logits = teacher_ref[...].astype(jnp.float32)   # [TB, C]
    labels = labels_ref[...]                                 # [TB, 1] int32

    TB, C = logits.shape

    # ---- teacher path ------------------------------------------------------
    # teacher_probs = exp(s_t)/Z_t with s_t = exp(t) - max(exp(t)); the Z_t^w
    # factor cancels between numerator and denominator of norm_tp, so we only
    # need exp(w * s_t).  (w in (0,1], s_t <= 0  =>  exp(w*s_t) <= 1, safe.)
    e_t = jnp.exp(teacher_logits)                            # exp #1
    s_t = e_t - jnp.max(e_t, axis=-1, keepdims=True)         # [TB, C], <= 0

    # ---- bias path: only the label column of softmax(exp(b)) is needed -----
    e_b = jnp.exp(bias_logits)                               # exp #2
    z_b = jnp.exp(e_b - jnp.max(e_b, axis=-1, keepdims=True))  # exp #3
    Z_b = jnp.sum(z_b, axis=-1, keepdims=True)               # [TB, 1]
    col_ids = jax.lax.broadcasted_iota(jnp.int32, (1, C), 1)  # (1, C) iota
    sel = jnp.sum(jnp.where(col_ids == labels, z_b, 0.0),     # masked select
                  axis=-1, keepdims=True)                     # [TB, 1]
    weights = 1.0 - sel / (Z_b * float(scaling_portion))      # [TB, 1] (1 div/row)

    # ---- teacher_probs ** weights, unnormalized (Z cancels) ----------------
    exp_tp = jnp.exp(weights * s_t)                           # exp #4  [TB, C]
    den = jnp.sum(exp_tp, axis=-1, keepdims=True)             # [TB, 1]

    # ---- log_softmax(logits) ------------------------------------------------
    lmax = jnp.max(logits, axis=-1, keepdims=True)
    lse = jnp.log(jnp.sum(jnp.exp(logits - lmax),              # exp #5
                          axis=-1, keepdims=True)) + lmax
    log_probs = logits - lse                                   # [TB, C]

    # cross entropy with soft targets: -sum_c (exp_tp/den) * log_probs
    num = jnp.sum(exp_tp * log_probs, axis=-1, keepdims=True)  # [TB, 1]
    row_loss = -num / den                                      # [TB, 1] (1 div/row)

    # mask rows past the real batch (partial last tile); jnp.where keeps any
    # NaN/Inf produced by padded garbage rows out of the sum.
    row_base = pl.program_id(0) * tile_rows
    row_ids = jax.lax.broadcasted_iota(jnp.int32, (TB, 1), 0) + row_base
    row_loss = jnp.where(row_ids < batch_size, row_loss, 0.0)

    tile_sum = jnp.sum(row_loss)                               # scalar
    # (8,128)-aligned, lane-dense, unmasked store of this tile's partial sum
    out_ref[...] = jnp.full((8, 128), tile_sum, dtype=jnp.float32)


def _vmem_limit_bytes() -> int:
    """Per-generation scoped-VMEM request (leave headroom for Mosaic scratch)."""
    try:
        cap = int(getattr(pltpu.get_tpu_info(), "vmem_capacity_bytes",
                          64 * 1024 * 1024))
    except Exception:                                   # conservative fallback
        cap = 64 * 1024 * 1024
    # ~3/4 of physical, capped at 100 MiB:
    #   v7x (64 MiB physical) -> 48 MiB, v5e/v6e (128 MiB) -> 96 MiB.
    return min((cap * 3) // 4, 100 * 1024 * 1024)


def _pick_tile_rows(B: int, C: int, vmem_limit: int) -> int:
    # Live VMEM per row: 3 inputs x 2 pipeline buffers + ~8 live f32 [TB,C]
    # temporaries (e_t/s_t/e_b/z_b/exp_tp/log_probs/... with compiler reuse).
    bytes_per_row = (3 * 2 + 8) * C * 4
    budget = int(vmem_limit * 0.8)
    tb = budget // max(bytes_per_row, 1)
    # element-count cap instead of a hard row clamp: big enough to amortize the
    # ~0.35 us/step overhead, small enough to keep vreg pressure sane.
    tb = min(tb, (512 * 1024) // max(C, 1))
    tb = max(8, (tb // 8) * 8)
    if B >= 16:
        # guarantee >= 2 grid tiles so v7x's two TensorCores both get work.
        half = -(-B // 2)
        half = -(-half // 8) * 8
        tb = min(tb, half)
    return B if tb >= B else tb


def smoothed_distill_loss(logits, bias_logits, teacher_logits, labels,
                          scaling_portion: int = 5, tile_rows=None):
    """logits/bias_logits/teacher_logits: [B, C] float; labels: [B] int -> scalar f32."""
    B, C = logits.shape
    labels_2d = labels.astype(jnp.int32).reshape(B, 1)

    vmem_limit = _vmem_limit_bytes()
    tb = _pick_tile_rows(B, C, vmem_limit) if tile_rows is None else int(tile_rows)
    num_tiles = -(-B // tb)

    kernel = functools.partial(_smoothed_distill_kernel,
                               scaling_portion=scaling_portion,
                               batch_size=B, tile_rows=tb)

    cost = pl.CostEstimate(
        flops=18 * B * C,                 # elementwise adds/muls + row reductions
        transcendentals=5 * B * C,        # the 5 inherent exps per element
        bytes_accessed=3 * B * C * 4 + B * 4 + num_tiles * 8 * 128 * 4,
    )

    partial = pl.pallas_call(
        kernel,
        out_shape=jax.ShapeDtypeStruct((num_tiles * 8, 128), jnp.float32),
        grid=(num_tiles,),
        in_specs=[
            pl.BlockSpec((tb, C), lambda i: (i, 0)),
            pl.BlockSpec((tb, C), lambda i: (i, 0)),
            pl.BlockSpec((tb, C), lambda i: (i, 0)),
            pl.BlockSpec((tb, 1), lambda i: (i, 0)),
        ],
        out_specs=pl.BlockSpec((8, 128), lambda i: (i, 0)),
        compiler_params=pltpu.CompilerParams(
            dimension_semantics=("parallel",),
            vmem_limit_bytes=vmem_limit),
        cost_estimate=cost,
    )(logits, bias_logits, teacher_logits, labels_2d)

    # each (8,128) block is filled with the same tile_sum; take row 0, lane 0.
    tile_sums = partial.reshape(num_tiles, 8, 128)[:, 0, 0]
    return jnp.sum(tile_sums) / B


def _reference(logits, bias_logits, teacher_logits, labels, scaling_portion=5):
    """Pure-JAX reference mirroring the PyTorch forward (for sanity checking)."""
    teacher_probs = jax.nn.softmax(jnp.exp(teacher_logits), axis=1)
    bias_probs = jax.nn.softmax(jnp.exp(bias_logits), axis=1)
    one_hot = jax.nn.one_hot(labels, logits.shape[1], dtype=jnp.float32)
    weights = 1.0 - jnp.sum(one_hot * bias_probs / scaling_portion, axis=1,
                            keepdims=True)
    exp_tp = teacher_probs ** weights
    norm_tp = exp_tp / jnp.sum(exp_tp, axis=1, keepdims=True)
    log_probs = jax.nn.log_softmax(logits, axis=1)
    return jnp.mean(-jnp.sum(norm_tp * log_probs, axis=1))


if __name__ == "__main__":
    key = jax.random.PRNGKey(0)

    # Case 1: small shapes from the module spec (single tile).
    B, C = 8, 16
    k1, k2, k3, k4, key = jax.random.split(key, 5)
    logits = jax.random.normal(k1, (B, C), dtype=jnp.float32)
    bias_logits = jax.random.normal(k2, (B, C), dtype=jnp.float32)
    teacher_logits = jax.random.normal(k3, (B, C), dtype=jnp.float32)
    labels = jax.random.randint(k4, (B,), 0, C, dtype=jnp.int32)

    loss = smoothed_distill_loss(logits, bias_logits, teacher_logits, labels)
    loss = jax.block_until_ready(loss)
    ref = _reference(logits, bias_logits, teacher_logits, labels)
    assert jnp.allclose(loss, ref, atol=1e-5, rtol=1e-5), (loss, ref)

    # Case 2: multi-tile path with a partial (masked) last tile.
    B2, C2 = 20, 16
    k1, k2, k3, k4, key = jax.random.split(key, 5)
    logits2 = jax.random.normal(k1, (B2, C2), dtype=jnp.float32)
    bias_logits2 = jax.random.normal(k2, (B2, C2), dtype=jnp.float32)
    teacher_logits2 = jax.random.normal(k3, (B2, C2), dtype=jnp.float32)
    labels2 = jax.random.randint(k4, (B2,), 0, C2, dtype=jnp.int32)

    loss2 = smoothed_distill_loss(logits2, bias_logits2, teacher_logits2,
                                  labels2, tile_rows=8)
    loss2 = jax.block_until_ready(loss2)
    ref2 = _reference(logits2, bias_logits2, teacher_logits2, labels2)
    assert jnp.allclose(loss2, ref2, atol=1e-5, rtol=1e-5), (loss2, ref2)

    # Case 3: auto-picked tile size on a larger batch (exercises >=2-tile rule).
    B3, C3 = 48, 16
    k1, k2, k3, k4, key = jax.random.split(key, 5)
    logits3 = jax.random.normal(k1, (B3, C3), dtype=jnp.float32)
    bias_logits3 = jax.random.normal(k2, (B3, C3), dtype=jnp.float32)
    teacher_logits3 = jax.random.normal(k3, (B3, C3), dtype=jnp.float32)
    labels3 = jax.random.randint(k4, (B3,), 0, C3, dtype=jnp.int32)

    loss3 = smoothed_distill_loss(logits3, bias_logits3, teacher_logits3, labels3)
    loss3 = jax.block_until_ready(loss3)
    ref3 = _reference(logits3, bias_logits3, teacher_logits3, labels3)
    assert jnp.allclose(loss3, ref3, atol=1e-5, rtol=1e-5), (loss3, ref3)

    print("KERNEL_OK")
</pallas_src>

<mosaic_0001>
module attributes {stable_mosaic.version = 11 : i64} {
  func.func @_smoothed_distill_kernel(%arg0: i32, %arg1: memref<8x16xf32, #tpu.memory_space<vmem>>, %arg2: memref<8x16xf32, #tpu.memory_space<vmem>>, %arg3: memref<8x16xf32, #tpu.memory_space<vmem>>, %arg4: memref<8x1xi32, #tpu.memory_space<vmem>>, %arg5: memref<8x128xf32, #tpu.memory_space<vmem>>) attributes {dimension_semantics = [#tpu.dimension_semantics<parallel>], iteration_bounds = array<i64: 1>, scalar_prefetch = 0 : i64, scratch_operands = 0 : i64, tpu.core_type = #tpu.core_type<tc>, window_params = [{transform_indices = @transform_0, window_bounds = array<i64: 8, 16>}, {transform_indices = @transform_1, window_bounds = array<i64: 8, 16>}, {transform_indices = @transform_2, window_bounds = array<i64: 8, 16>}, {transform_indices = @transform_3, window_bounds = array<i64: 8, 1>}, {transform_indices = @transform_4, window_bounds = array<i64: 8, 128>}]} {
    %c0 = arith.constant 0 : index
    %c0_0 = arith.constant 0 : index
    %0 = vector.load %arg1[%c0, %c0_0] : memref<8x16xf32, #tpu.memory_space<vmem>>, vector<8x16xf32>
    %c0_1 = arith.constant 0 : index
    %c0_2 = arith.constant 0 : index
    %1 = vector.load %arg2[%c0_1, %c0_2] : memref<8x16xf32, #tpu.memory_space<vmem>>, vector<8x16xf32>
    %c0_3 = arith.constant 0 : index
    %c0_4 = arith.constant 0 : index
    %2 = vector.load %arg3[%c0_3, %c0_4] : memref<8x16xf32, #tpu.memory_space<vmem>>, vector<8x16xf32>
    %c0_5 = arith.constant 0 : index
    %c0_6 = arith.constant 0 : index
    %3 = vector.load %arg4[%c0_5, %c0_6] : memref<8x1xi32, #tpu.memory_space<vmem>>, vector<8x1xi32>
    %4 = math.exp %2 : vector<8x16xf32>
    %cst = arith.constant dense<0xFF800000> : vector<8xf32>
    %5 = vector.multi_reduction <maximumf>, %4, %cst [1] : vector<8x16xf32> to vector<8xf32>
    %6 = vector.shape_cast %5 : vector<8xf32> to vector<8x1xf32>
    %7 = vector.broadcast %6 : vector<8x1xf32> to vector<8x16xf32>
    %8 = arith.subf %4, %7 : vector<8x16xf32>
    %9 = math.exp %1 : vector<8x16xf32>
    %cst_7 = arith.constant dense<0xFF800000> : vector<8xf32>
    %10 = vector.multi_reduction <maximumf>, %9, %cst_7 [1] : vector<8x16xf32> to vector<8xf32>
    %11 = vector.shape_cast %10 : vector<8xf32> to vector<8x1xf32>
    %12 = vector.broadcast %11 : vector<8x1xf32> to vector<8x16xf32>
    %13 = arith.subf %9, %12 : vector<8x16xf32>
    %14 = math.exp %13 : vector<8x16xf32>
    %cst_8 = arith.constant dense<0.000000e+00> : vector<8xf32>
    %15 = vector.multi_reduction <add>, %14, %cst_8 [1] : vector<8x16xf32> to vector<8xf32>
    %16 = vector.shape_cast %15 : vector<8xf32> to vector<8x1xf32>
    %17 = tpu.iota {dimensions = array<i32: 1>} : vector<1x16xi32>
    %18 = vector.broadcast %17 : vector<1x16xi32> to vector<8x16xi32>
    %19 = vector.broadcast %3 : vector<8x1xi32> to vector<8x16xi32>
    %20 = arith.cmpi eq, %18, %19 : vector<8x16xi32>
    %cst_9 = arith.constant 0.000000e+00 : f32
    %21 = vector.broadcast %cst_9 : f32 to vector<8x16xf32>
    %22 = arith.select %20, %14, %21 : vector<8x16xi1>, vector<8x16xf32>
    %cst_10 = arith.constant dense<0.000000e+00> : vector<8xf32>
    %23 = vector.multi_reduction <add>, %22, %cst_10 [1] : vector<8x16xf32> to vector<8xf32>
    %24 = vector.shape_cast %23 : vector<8xf32> to vector<8x1xf32>
    %cst_11 = arith.constant 5.000000e+00 : f32
    %25 = vector.broadcast %cst_11 : f32 to vector<8x1xf32>
    %26 = arith.mulf %16, %25 : vector<8x1xf32>
    %27 = arith.divf %24, %26 : vector<8x1xf32>
    %cst_12 = arith.constant 1.000000e+00 : f32
    %28 = vector.broadcast %cst_12 : f32 to vector<8x1xf32>
    %29 = arith.subf %28, %27 : vector<8x1xf32>
    %30 = vector.broadcast %29 : vector<8x1xf32> to vector<8x16xf32>
    %31 = arith.mulf %30, %8 : vector<8x16xf32>
    %32 = math.exp %31 : vector<8x16xf32>
    %cst_13 = arith.constant dense<0.000000e+00> : vector<8xf32>
    %33 = vector.multi_reduction <add>, %32, %cst_13 [1] : vector<8x16xf32> to vector<8xf32>
    %34 = vector.shape_cast %33 : vector<8xf32> to vector<8x1xf32>
    %cst_14 = arith.constant dense<0xFF800000> : vector<8xf32>
    %35 = vector.multi_reduction <maximumf>, %0, %cst_14 [1] : vector<8x16xf32> to vector<8xf32>
    %36 = vector.shape_cast %35 : vector<8xf32> to vector<8x1xf32>
    %37 = vector.broadcast %36 : vector<8x1xf32> to vector<8x16xf32>
    %38 = arith.subf %0, %37 : vector<8x16xf32>
    %39 = math.exp %38 : vector<8x16xf32>
    %cst_15 = arith.constant dense<0.000000e+00> : vector<8xf32>
    %40 = vector.multi_reduction <add>, %39, %cst_15 [1] : vector<8x16xf32> to vector<8xf32>
    %41 = vector.shape_cast %40 : vector<8xf32> to vector<8x1xf32>
    %42 = math.log %41 : vector<8x1xf32>
    %43 = arith.addf %42, %36 : vector<8x1xf32>
    %44 = vector.broadcast %43 : vector<8x1xf32> to vector<8x16xf32>
    %45 = arith.subf %0, %44 : vector<8x16xf32>
    %46 = arith.mulf %32, %45 : vector<8x16xf32>
    %cst_16 = arith.constant dense<0.000000e+00> : vector<8xf32>
    %47 = vector.multi_reduction <add>, %46, %cst_16 [1] : vector<8x16xf32> to vector<8xf32>
    %48 = vector.shape_cast %47 : vector<8xf32> to vector<8x1xf32>
    %cst_17 = arith.constant 0.000000e+00 : f32
    %49 = vector.broadcast %cst_17 : f32 to vector<8x1xf32>
    %50 = arith.subf %49, %48 : vector<8x1xf32>
    %51 = arith.divf %50, %34 : vector<8x1xf32>
    %c8_i32 = arith.constant 8 : i32
    %52 = arith.muli %arg0, %c8_i32 : i32
    %53 = tpu.iota {dimensions = array<i32: 0>} : vector<8x1xi32>
    %54 = vector.broadcast %52 : i32 to vector<8x1xi32>
    %55 = arith.addi %53, %54 : vector<8x1xi32>
    %c8_i32_18 = arith.constant 8 : i32
    %56 = vector.broadcast %c8_i32_18 : i32 to vector<8x1xi32>
    %57 = arith.cmpi slt, %55, %56 : vector<8x1xi32>
    %cst_19 = arith.constant 0.000000e+00 : f32
    %58 = vector.broadcast %cst_19 : f32 to vector<8x1xf32>
    %59 = arith.select %57, %51, %58 : vector<8x1xi1>, vector<8x1xf32>
    %60 = vector.shape_cast %59 : vector<8x1xf32> to vector<1x8x1xf32>
    %cst_20 = arith.constant dense<0.000000e+00> : vector<1xf32>
    %61 = vector.multi_reduction <add>, %60, %cst_20 [1, 2] : vector<1x8x1xf32> to vector<1xf32>
    %62 = vector.shape_cast %61 : vector<1xf32> to vector<1x1x1xf32>
    %63 = vector.extract %62[0, 0, 0] : f32 from vector<1x1x1xf32>
    %64 = vector.broadcast %63 : f32 to vector<8x128xf32>
    %c0_21 = arith.constant 0 : index
    %c0_22 = arith.constant 0 : index
    %65 = vector.load %arg5[%c0_21, %c0_22] : memref<8x128xf32, #tpu.memory_space<vmem>>, vector<8x128xf32>
    tpu.vector_store %arg5[%c0_21, %c0_22], %64 {strides = array<i32>} : memref<8x128xf32, #tpu.memory_space<vmem>>, vector<8x128xf32>,
    return
  }
  func.func @transform_0(%arg0: i32) -> (i32, i32) {
    %c0_i32 = arith.constant 0 : i32
    %c0_i32_0 = arith.constant 0 : i32
    return %arg0, %c0_i32 : i32, i32
  }
  func.func @transform_1(%arg0: i32) -> (i32, i32) {
    %c0_i32 = arith.constant 0 : i32
    %c0_i32_0 = arith.constant 0 : i32
    return %arg0, %c0_i32 : i32, i32
  }
  func.func @transform_2(%arg0: i32) -> (i32, i32) {
    %c0_i32 = arith.constant 0 : i32
    %c0_i32_0 = arith.constant 0 : i32
    return %arg0, %c0_i32 : i32, i32
  }
  func.func @transform_3(%arg0: i32) -> (i32, i32) {
    %c0_i32 = arith.constant 0 : i32
    %c0_i32_0 = arith.constant 0 : i32
    return %arg0, %c0_i32 : i32, i32
  }
  func.func @transform_4(%arg0: i32) -> (i32, i32) {
    %c0_i32 = arith.constant 0 : i32
    %c0_i32_0 = arith.constant 0 : i32
    return %arg0, %c0_i32 : i32, i32
  }
}

</mosaic_0001>

<llo_original>
// kernel: tpu_custom_call.1
$region0: #{tpu_custom_call.1}
  #allocation0 [shape = 'u32[]', space=smem, size = 0x4, offset = 0x4, fixed_abs, tag = 'smem constant byte address 0x4 - core index']
  #allocation1 [shape = 'u32[144,128]{1,0:T(1,128)}', space=vmem, size = 0x12000, scoped, tag = 'internal scratch']
  %s0 = inlined_call_operand.vmem [shape: f32[8,16], index: 0, kind: input, shape index: {}]
  %s1 = inlined_call_operand.hbm [shape: f32[8,16], index: 1, kind: input, shape index: {}]
  %s2 = inlined_call_operand.hbm [shape: f32[8,16], index: 2, kind: input, shape index: {}]
  %s3 = inlined_call_operand.vmem [shape: s32[8,1], index: 3, kind: input, shape index: {}]
  %s4 = inlined_call_operand.hbm [shape: f32[8,128], index: 4, kind: output, shape index: {}]
  %s5 = sld [smem:[#allocation0]]
  $region34: #{tpu_custom_call.1} parent=0
    _
  %s7 = ssub.s32 1, %s5
  %s8 = scalar_select 0, %s7, %s5
  $region1: #{tpu_custom_call.1} parent=0
    #allocation2 [shape = 'u8[4096]{0}', space=vmem, size = 0x1000, scoped, tag = 'input window, operand 1, single buffered']
    #allocation3 [shape = 's32[1]{0}', space=sflag, size = 0x4, scoped, tag = 'scoped memory for tpu_custom_call.1']
    #allocation4 [shape = 's32[1]{0}', space=sflag, size = 0x4, scoped, tag = 'scoped memory for tpu_custom_call.1']
    #allocation5 [shape = 'u8[4096]{0}', space=vmem, size = 0x1000, scoped, tag = 'input window, operand 2, single buffered']
    #allocation6 [shape = 's32[1]{0}', space=sflag, size = 0x4, scoped, tag = 'scoped memory for tpu_custom_call.1']
    #allocation7 [shape = 'u8[4096]{0}', space=vmem, size = 0x1000, scoped, tag = 'output window, operand 0, single buffered']
    %9 = vsyncpa [#allocation3], 0
    %10 = vsyncpa [#allocation6], 0
    %11 = vsyncpa [#allocation4], 0
    // Predicated region
    $region2: #{tpu_custom_call.1} parent=1 // pred_check
      _
    $region3: #{tpu_custom_call.1} parent=1 // pred_check_branch
      %13 = sbr.rel (0) target = $region5
    $region4: #{tpu_custom_call.1} parent=1 // pred_region
      _
    $region5: #{tpu_custom_call.1} parent=1 // pred_fallthru
      _
    // Predicated region
    $region6: #{tpu_custom_call.1} parent=1 // pred_check
      _
    $region7: #{tpu_custom_call.1} parent=1 // pred_check_branch
      %15 = sbr.rel (0) target = $region9
    $region8: #{tpu_custom_call.1} parent=1 // pred_region
      %s17 = ssub.s32 128, 128
      %18 = vsyncadd [#allocation3], %s17
      %s20 = sshll.u32 [#allocation2], 4
      %s21 = int_to_ptr.vmem [resolvable:$true] %s20
      %23 = dma.hbm_to_vmem [thread:$0]  %s1, 128, %s21, [#allocation3]
    $region9: #{tpu_custom_call.1} parent=1 // pred_fallthru
      _
    // Predicated region
    $region10: #{tpu_custom_call.1} parent=1 // pred_check
      _
    $region11: #{tpu_custom_call.1} parent=1 // pred_check_branch
      %25 = sbr.rel (0) target = $region13
    $region12: #{tpu_custom_call.1} parent=1 // pred_region
      %s27 = ssub.s32 128, 128
      %28 = vsyncadd [#allocation6], %s27
      %s30 = sshll.u32 [#allocation5], 4
      %s31 = int_to_ptr.vmem [resolvable:$true] %s30
      %33 = dma.hbm_to_vmem [thread:$0]  %s2, 128, %s31, [#allocation6]
    $region13: #{tpu_custom_call.1} parent=1 // pred_fallthru
      _
    // Predicated region
    $region14: #{tpu_custom_call.1} parent=1 // pred_check
      _
    $region15: #{tpu_custom_call.1} parent=1 // pred_check_branch
      %35 = sbr.rel (0) target = $region17
    $region16: #{tpu_custom_call.1} parent=1 // pred_region
      _
    $region17: #{tpu_custom_call.1} parent=1 // pred_fallthru
      _
    // Predicated region
    $region18: #{tpu_custom_call.1} parent=1 // pred_check
      _
    $region19: #{tpu_custom_call.1} parent=1 // pred_check_branch
      %37 = sbr.rel (0) target = $region21
    $region20: #{tpu_custom_call.1} parent=1 // pred_region
      %38 = dma.done [#allocation3], 128
    $region21: #{tpu_custom_call.1} parent=1 // pred_fallthru
      _
    // Predicated region
    $region22: #{tpu_custom_call.1} parent=1 // pred_check
      _
    $region23: #{tpu_custom_call.1} parent=1 // pred_check_branch
      %40 = sbr.rel (0) target = $region25
    $region24: #{tpu_custom_call.1} parent=1 // pred_region
      %41 = dma.done [#allocation6], 128
    $region25: #{tpu_custom_call.1} parent=1 // pred_fallthru
      _
    %v42 = vld [vmem:[%s0] sm:$0xff]
    %v43 = vld [vmem:[#allocation2] sm:$0xff]
    %v44 = vld [vmem:[#allocation5] sm:$0xff]
    %v45 = vld [vmem:[%s3] sm:$0xff]
    %v46 = vmul.f32 %v44, 1.442695
    %v47 = vpow.pop %v46
    %vm48 = vcmask 130048
    %v49 = vsel %vm48, %v47, -inf
    %50 = vmax.xlane.f32.xlu0 %v49
    %v51 = vpop.xlane.xlu0 %50
    %v52 = vsub.f32 %v47, %v51
    %v53 = vmul.f32 %v43, 1.442695
    %v54 = vpow.pop %v53
    %v55 = vsel %vm48, %v54, -inf
    %56 = vmax.xlane.f32.xlu0 %v55
    %v57 = vpop.xlane.xlu0 %56
    %v58 = vsub.f32 %v54, %v57
    %v59 = vmul.f32 %v58, 1.442695
    %v60 = vpow.pop %v59
    %v61 = vsel %vm48, %v60, 0.0
    %62 = vadd.xlane.f32.xlu0 %v61
    %v63 = vpop.xlane.xlu0 %62
    %v64 = vlaneseq
    %v65 = vand.u32 %v64, 127
    %66 = vset.pattern.permute.xlu0 0
    %67 = vperm.xlu0 %66, %v45
    %v68 = vpop.permute.xlu0 %67
    %vm69 = vcmp.eq.s32.totalorder %v65, %v68
    %v70 = vsel %vm69, %v60, 0.0
    %v71 = vsel %vm48, %v70, 0.0
    %72 = vadd.xlane.f32.xlu0 %v71
    %v73 = vpop.xlane.xlu0 %72
    %v74 = vmul.f32 %v63, 5.0
    %v75 = vrcp.pop %v74
    %v76 = vmul.f32 %v73, %v75
    %v77 = vsub.f32 1.0, %v76
    %v78 = vmul.f32 %v77, %v52
    %v79 = vmul.f32 %v78, 1.442695
    %v80 = vpow.pop %v79
    %v81 = vsel %vm48, %v80, 0.0
    %82 = vadd.xlane.f32.xlu0 %v81
    %v83 = vpop.xlane.xlu0 %82
    %v84 = vsel %vm48, %v42, -inf
    %85 = vmax.xlane.f32.xlu0 %v84
    %v86 = vpop.xlane.xlu0 %85
    %v87 = vsub.f32 %v42, %v86
    %v88 = vmul.f32 %v87, 1.442695
    %v89 = vpow.pop %v88
    %v90 = vsel %vm48, %v89, 0.0
    %91 = vadd.xlane.f32.xlu0 %v90
    %v92 = vpop.xlane.xlu0 %91
    %v93 = vlog2.pop %v92
    %v94 = vmul.f32 %v93, 0.6931472
    %v95 = vadd.f32 %v94, %v86
    %v96 = vsub.f32 %v42, %v95
    %v97 = vmul.f32 %v80, %v96
    %v98 = vsel %vm48, %v97, 0.0
    %99 = vadd.xlane.f32.xlu0 %v98
    %v100 = vpop.xlane.xlu0 %99
    %v101 = vsub.f32 0.0, %v100
    %v102 = vrcp.pop %v83
    %v103 = vmul.f32 %v101, %v102
    %s104 = smul.u32 0, 8
    %v105 = vlaneseq
    %v106 = vshrl.u32 %v105, 7
    %v107 = vstv %s104
    %v108 = vadd.s32 %v106, %v107
    %vm109 = vcmp.lt.s32.totalorder %v108, 8
    %v110 = vsel %vm109, %v103, 0.0
    %vm111 = vcmask 7168
    %v112 = vsel %vm111, %v110, 0.0
    %113 = vadd.xlane.f32.xlu0 %v112
    %v114 = vpop.xlane.xlu0 %113
    %v115 = vrot.slane %v114, 4
    %v116 = vadd.f32 %v114, %v115
    %v117 = vrot.slane %v116, 2
    %v118 = vadd.f32 %v116, %v117
    %v119 = vrot.slane %v118, 1
    %v120 = vadd.f32 %v118, %v119
    %s121 = vtos %v120
    %v122 = vstv %s121
    %123 = vst [vmem:[#allocation7] sm:$0xff] %v122
    // Predicated region
    $region26: #{tpu_custom_call.1} parent=1 // pred_check
      _
    $region27: #{tpu_custom_call.1} parent=1 // pred_check_branch
      %125 = sbr.rel (0) target = $region29
    $region28: #{tpu_custom_call.1} parent=1 // pred_region
      %s127 = ssub.s32 128, 128
      %128 = vsyncadd [#allocation4], %s127
      %s130 = sshll.u32 [#allocation7], 4
      %s131 = int_to_ptr.vmem [resolvable:$true] %s130
      %133 = dma.vmem_to_hbm [thread:$0]  %s131, 128, %s4, [#allocation4]
    $region29: #{tpu_custom_call.1} parent=1 // pred_fallthru
      _
    // Predicated region
    $region30: #{tpu_custom_call.1} parent=1 // pred_check
      _
    $region31: #{tpu_custom_call.1} parent=1 // pred_check_branch
      %135 = sbr.rel (0) target = $region33
    $region32: #{tpu_custom_call.1} parent=1 // pred_region
      %136 = dma.done [#allocation4], 128
    $region33: #{tpu_custom_call.1} parent=1 // pred_fallthru
      _
    %137 = vsyncpa [#allocation3], 1
    %138 = vsyncpa [#allocation6], 1
    %139 = vsyncpa [#allocation4], 1

</llo_original>
